<compile_context>
chip_gen: v6e
topology: v6e:2x2x1
jax: 0.10.0
libtpu: 0.0.40
codegen_flags: <defaults>
</compile_context>

<pallas_src>
import functools

import jax
import jax.numpy as jnp
from jax.experimental import pallas as pl
from jax.experimental.pallas import tpu as pltpu

_BLOCK_ELEMS = 512 * 1024          # ~2 MiB per f32 input block
_VMEM_LIMIT = 32 * 1024 * 1024     # explicit headroom (v5e default is 16 MiB)


def _num_tensorcores() -> int:
    """Best-effort TensorCores-per-chip (v7x megacore = 2, v5e/v6e = 1)."""
    try:
        info = pltpu.get_tpu_info()
        for attr in ("num_cores", "core_count", "cores_per_chip",
                     "num_tensorcores", "tensorcore_count"):
            v = getattr(info, attr, None)
            if isinstance(v, int) and v >= 1:
                return int(v)
    except Exception:
        pass
    try:
        kind = jax.devices()[0].device_kind.lower()
        if "v7" in kind:
            return 2
    except Exception:
        pass
    return 1


def _pow_static(x, gamma):
    """x ** gamma with gamma a static Python float (VPU mults for int gamma)."""
    g = float(gamma)
    if g == int(g) and 0 <= int(g) <= 8:
        gi = int(g)
        if gi == 0:
            return jnp.ones_like(x)
        r = x
        for _ in range(gi - 1):
            r = r * x
        return r
    # Non-integer gamma: clamp base at 0 to avoid NaN from fp noise in (1-pt).
    return jnp.power(jnp.maximum(x, 0.0), g)


def _focal_elements(p, t, alpha, gamma, logits, binary_targets):
    """Elementwise focal loss in f32 (matches PyTorch semantics)."""
    p = p.astype(jnp.float32)
    t = t.astype(jnp.float32)
    if logits:
        # F.binary_cross_entropy_with_logits (stable form)
        bce = jnp.maximum(p, 0.0) - p * t + jnp.log1p(jnp.exp(-jnp.abs(p)))
        pt = jnp.exp(-bce)
    elif binary_targets:
        # Hard {0,1} targets: algebraically identical to BCE, but only one
        # transcendental (log) per element instead of three.
        pt = jnp.where(t >= 0.5, p, 1.0 - p)
        bce = -jnp.maximum(jnp.log(pt), -100.0)
    else:
        # F.binary_cross_entropy clamps log terms at -100
        log_p = jnp.maximum(jnp.log(p), -100.0)
        log_1mp = jnp.maximum(jnp.log1p(-p), -100.0)
        bce = -(t * log_p + (1.0 - t) * log_1mp)
        pt = jnp.exp(-bce)
    return alpha * _pow_static(1.0 - pt, gamma) * bce


def _focal_sum_kernel(pred_ref, tgt_ref, out_ref, acc_ref, *, alpha, gamma,
                      logits, binary_targets, block_rows, acc_rows,
                      blocks_per_split, n_blocks, clean_blocks, full_rows,
                      rem, need_mask, guard_overflow):
    """Per-split partial-sum kernel. grid = (n_splits, blocks_per_split)."""
    j = pl.program_id(1)
    gb = pl.program_id(0) * blocks_per_split + j      # global row-block index

    def fold(x):
        # (block_rows, W) -> (acc_rows, W). Sublane-group slabs are
        # (8,128)-tile aligned, so this is pure VALU adds (no relayout).
        if block_rows == acc_rows:
            return x
        return x.reshape(block_rows // acc_rows, acc_rows,
                         x.shape[-1]).sum(axis=0)

    def accum(folded):
        @pl.when(j == 0)
        def _():
            acc_ref[...] = folded               # first-step assignment

        @pl.when(j > 0)
        def _():
            acc_ref[...] = acc_ref[...] + folded

    def compute_and_accum():
        f = _focal_elements(pred_ref[...], tgt_ref[...], alpha, gamma,
                            logits, binary_targets)
        if need_mask:
            # Only blocks past `clean_blocks` can contain invalid (padded /
            # OOB) rows; everything before takes the unmasked fast path.
            @pl.when(gb < clean_blocks)
            def _():
                accum(fold(f))

            @pl.when(gb >= clean_blocks)
            def _():
                # Row-based validity test (no flat-index int32 overflow).
                grow = gb * block_rows + jax.lax.broadcasted_iota(
                    jnp.int32, f.shape, 0)
                valid = grow < full_rows
                if rem:
                    col = jax.lax.broadcasted_iota(jnp.int32, f.shape, 1)
                    valid = valid | ((grow == full_rows) & (col < rem))
                accum(fold(jnp.where(valid, f, 0.0)))
        else:
            accum(fold(f))

    if guard_overflow:
        # Odd block count split over 2 cores: the clamped index_map re-reads
        # the last real block; skip its compute/accumulation here.
        @pl.when(gb < n_blocks)
        def _():
            compute_and_accum()
    else:
        compute_and_accum()

    @pl.when(j == pl.num_programs(1) - 1)
    def _():
        out_ref[...] = jnp.full(out_ref.shape, jnp.sum(acc_ref[...]),
                                dtype=jnp.float32)


def _focal_ew_kernel(pred_ref, tgt_ref, out_ref, *, alpha, gamma, logits,
                     binary_targets):
    out_ref[...] = _focal_elements(
        pred_ref[...], tgt_ref[...], alpha, gamma, logits, binary_targets
    ).astype(out_ref.dtype)


def focal_loss(pred, targets, *, alpha=1.0, gamma=2.0, logits=False,
               reduce=True, binary_targets=False):
    """JAX/Pallas equivalent of FocalLoss.forward.

    Accepts f32 or bf16 inputs; bf16 stays bf16 through the HBM pipeline
    (upcast happens per-block inside the kernel). `binary_targets=True` is an
    optional fast path valid only when targets are hard {0,1} labels.
    """
    assert pred.shape == targets.shape
    orig_shape = pred.shape
    orig_dtype = pred.dtype
    n = int(pred.size)
    assert n > 0

    flat_p = pred.reshape(-1)
    flat_t = targets.reshape(-1)

    # Widest lane dim that divides n -> reshape is a free bitcast (no copy).
    width = None
    for w in (1024, 512, 256, 128):
        if n % w == 0:
            width = w
            break
    padded = False
    if width is None:
        # Rare fallback: pad to a multiple of 128 (costs one input copy).
        width = 128
        n_pad = (-n) % width
        flat_p = jnp.concatenate(
            [flat_p, jnp.full((n_pad,), 0.5, flat_p.dtype)])
        flat_t = jnp.concatenate(
            [flat_t, jnp.full((n_pad,), 0.5, flat_t.dtype)])
        padded = True

    rows = flat_p.size // width
    p2d = flat_p.reshape(rows, width)
    t2d = flat_t.reshape(rows, width)

    # Rows per block: ~2 MiB f32 blocks; block rows must be a multiple of 8
    # or equal the full row extent (small-input case).
    bm = _BLOCK_ELEMS // width
    if rows <= bm:
        bm = rows
    nb = (rows + bm - 1) // bm     # number of row-blocks (last may be partial)

    itemsize = jnp.dtype(orig_dtype).itemsize
    in_bytes = 2 * rows * width * itemsize
    trans_per_elem = 3 if logits else (1 if binary_targets else 3)

    kern_kwargs = dict(alpha=float(alpha), gamma=float(gamma),
                       logits=bool(logits),
                       binary_targets=bool(binary_targets))

    if reduce:
        # Split row-blocks across TensorCores when the chip actually has >1
        # (v7x megacore); single-TC chips (v5e/v6e) keep a single split.
        n_cores = _num_tensorcores()
        n_splits = 2 if (n_cores >= 2 and nb >= 2) else 1
        bps = (nb + n_splits - 1) // n_splits
        guard_overflow = (n_splits * bps != nb)

        acc_rows = 8 if bm % 8 == 0 else bm     # one sublane group when possible

        full_rows_valid = n // width   # rows that are entirely valid
        rem = n % width                # valid elements in the next row
        clean_blocks = full_rows_valid // bm
        need_mask = clean_blocks < nb

        kernel = functools.partial(
            _focal_sum_kernel, block_rows=bm, acc_rows=acc_rows,
            blocks_per_split=bps, n_blocks=nb, clean_blocks=clean_blocks,
            full_rows=full_rows_valid, rem=rem, need_mask=need_mask,
            guard_overflow=guard_overflow, **kern_kwargs)

        if guard_overflow:
            def in_map(s, j):
                return (jnp.minimum(s * bps + j, nb - 1), 0)
        else:
            def in_map(s, j):
                return (s * bps + j, 0)

        cost = pl.CostEstimate(
            flops=15 * n,
            transcendentals=trans_per_elem * n,
            bytes_accessed=in_bytes + n_splits * 8 * 128 * 4)

        partials = pl.pallas_call(
            kernel,
            out_shape=jax.ShapeDtypeStruct((n_splits, 8, 128), jnp.float32),
            grid_spec=pltpu.PrefetchScalarGridSpec(
                num_scalar_prefetch=0,
                grid=(n_splits, bps),
                in_specs=[
                    pl.BlockSpec((bm, width), in_map),
                    pl.BlockSpec((bm, width), in_map),
                ],
                out_specs=pl.BlockSpec((1, 8, 128), lambda s, j: (s, 0, 0)),
                scratch_shapes=[pltpu.VMEM((acc_rows, width), jnp.float32)],
            ),
            compiler_params=pltpu.CompilerParams(
                dimension_semantics=("parallel", "arbitrary"),
                vmem_limit_bytes=_VMEM_LIMIT),
            cost_estimate=cost,
        )(p2d, t2d)

        total = jnp.sum(partials[:, 0, 0])
        return (total / jnp.float32(n)).astype(orig_dtype)
    else:
        cost = pl.CostEstimate(
            flops=15 * n,
            transcendentals=trans_per_elem * n,
            bytes_accessed=in_bytes + rows * width * itemsize)

        kernel = functools.partial(_focal_ew_kernel, **kern_kwargs)
        out2d = pl.pallas_call(
            kernel,
            out_shape=jax.ShapeDtypeStruct((rows, width), orig_dtype),
            grid_spec=pltpu.PrefetchScalarGridSpec(
                num_scalar_prefetch=0,
                grid=(nb,),
                in_specs=[
                    pl.BlockSpec((bm, width), lambda i: (i, 0)),
                    pl.BlockSpec((bm, width), lambda i: (i, 0)),
                ],
                out_specs=pl.BlockSpec((bm, width), lambda i: (i, 0)),
            ),
            compiler_params=pltpu.CompilerParams(
                dimension_semantics=("parallel",),
                vmem_limit_bytes=_VMEM_LIMIT),
            cost_estimate=cost,
        )(p2d, t2d)
        if padded:
            return out2d.reshape(-1)[:n].reshape(orig_shape)
        return out2d.reshape(orig_shape)


def _focal_loss_ref(pred, targets, alpha=1.0, gamma=2.0, logits=False,
                    reduce=True):
    f = _focal_elements(pred, targets, alpha, gamma, logits, False)
    return jnp.mean(f) if reduce else f


if __name__ == "__main__":
    key = jax.random.PRNGKey(0)
    k1, k2 = jax.random.split(key)

    # NCHW-shaped inputs, same as the PyTorch module would see.
    shape = (2, 4, 16, 16)
    pred = jax.nn.sigmoid(jax.random.normal(k1, shape, dtype=jnp.float32))
    targets = jax.random.uniform(k2, shape, dtype=jnp.float32)

    # reduce=True (default): scalar mean focal loss
    out = focal_loss(pred, targets, alpha=1.0, gamma=2.0, logits=False,
                     reduce=True)
    out = jax.block_until_ready(out)
    ref = _focal_loss_ref(pred, targets, 1.0, 2.0, False, True)
    assert jnp.allclose(out, ref, rtol=1e-5, atol=1e-6), (out, ref)

    # reduce=False: elementwise focal loss, same shape as input
    out_ew = focal_loss(pred, targets, reduce=False)
    out_ew = jax.block_until_ready(out_ew)
    ref_ew = _focal_loss_ref(pred, targets, 1.0, 2.0, False, False)
    assert out_ew.shape == shape
    assert jnp.allclose(out_ew, ref_ew, rtol=1e-5, atol=1e-6)

    # logits=True path
    logits_in = jax.random.normal(k1, shape, dtype=jnp.float32)
    out_lg = focal_loss(logits_in, targets, logits=True, reduce=True)
    out_lg = jax.block_until_ready(out_lg)
    ref_lg = _focal_loss_ref(logits_in, targets, 1.0, 2.0, True, True)
    assert jnp.allclose(out_lg, ref_lg, rtol=1e-5, atol=1e-6)

    # Odd (non-128-divisible) shape: exercises the pad + in-kernel mask path.
    shape_odd = (3, 5, 7, 11)
    k3, k4 = jax.random.split(k2)
    pred_odd = jax.nn.sigmoid(jax.random.normal(k3, shape_odd, jnp.float32))
    tgt_odd = jax.random.uniform(k4, shape_odd, dtype=jnp.float32)
    out_odd = jax.block_until_ready(focal_loss(pred_odd, tgt_odd, reduce=True))
    ref_odd = _focal_loss_ref(pred_odd, tgt_odd, 1.0, 2.0, False, True)
    assert jnp.allclose(out_odd, ref_odd, rtol=1e-5, atol=1e-6), (out_odd,
                                                                  ref_odd)
    out_odd_ew = jax.block_until_ready(focal_loss(pred_odd, tgt_odd,
                                                  reduce=False))
    ref_odd_ew = _focal_loss_ref(pred_odd, tgt_odd, 1.0, 2.0, False, False)
    assert out_odd_ew.shape == shape_odd
    assert jnp.allclose(out_odd_ew, ref_odd_ew, rtol=1e-5, atol=1e-6)

    # Multi-block clean path (small accumulator + cross-step accumulation,
    # and the 2-way TC split when available).
    k5, k6 = jax.random.split(k3)
    shape_big = (2048, 512)          # 1Mi elems -> width 1024, 2 row-blocks
    pred_big = jax.nn.sigmoid(jax.random.normal(k5, shape_big, jnp.float32))
    tgt_big = jax.random.uniform(k6, shape_big, dtype=jnp.float32)
    out_big = jax.block_until_ready(focal_loss(pred_big, tgt_big, reduce=True))
    ref_big = _focal_loss_ref(pred_big, tgt_big, 1.0, 2.0, False, True)
    assert jnp.allclose(out_big, ref_big, rtol=1e-5, atol=1e-6), (out_big,
                                                                  ref_big)

    # Multi-block with a partial (masked) tail block: logits=False focal loss
    # computed on OOB/pad garbage before masking must not leak into the sum.
    k7, k8 = jax.random.split(k5)
    shape_tail = (9000, 130)         # padded width 128, 3 row-blocks, odd nb
    pred_tail = jax.nn.sigmoid(jax.random.normal(k7, shape_tail, jnp.float32))
    tgt_tail = jax.random.uniform(k8, shape_tail, dtype=jnp.float32)
    out_tail = jax.block_until_ready(focal_loss(pred_tail, tgt_tail,
                                                reduce=True))
    ref_tail = _focal_loss_ref(pred_tail, tgt_tail, 1.0, 2.0, False, True)
    assert jnp.allclose(out_tail, ref_tail, rtol=1e-5, atol=1e-6), (out_tail,
                                                                    ref_tail)

    # Binary-target fast path (1 transcendental/elem) vs general reference.
    tgt_bin = (jax.random.uniform(k4, shape) > 0.5).astype(jnp.float32)
    out_bin = jax.block_until_ready(
        focal_loss(pred, tgt_bin, reduce=True, binary_targets=True))
    ref_bin = _focal_loss_ref(pred, tgt_bin, 1.0, 2.0, False, True)
    assert jnp.allclose(out_bin, ref_bin, rtol=1e-5, atol=1e-5), (out_bin,
                                                                  ref_bin)

    # bf16 inputs stay bf16 through the HBM pipeline (halves bytes on v5e/v6e).
    pred_bf = pred.astype(jnp.bfloat16)
    tgt_bf = targets.astype(jnp.bfloat16)
    out_bf = jax.block_until_ready(focal_loss(pred_bf, tgt_bf, reduce=True))
    ref_bf = _focal_loss_ref(pred_bf, tgt_bf, 1.0, 2.0, False, True)
    assert out_bf.dtype == jnp.bfloat16
    assert jnp.allclose(jnp.float32(out_bf), jnp.float32(ref_bf), rtol=2e-2)

    print("KERNEL_OK")
</pallas_src>

<mosaic_0001>
module attributes {stable_mosaic.version = 11 : i64} {
  func.func @_focal_sum_kernel(%arg0: i32, %arg1: i32, %arg2: memref<2x1024xf32, #tpu.memory_space<vmem>>, %arg3: memref<2x1024xf32, #tpu.memory_space<vmem>>, %arg4: memref<1x8x128xf32, #tpu.memory_space<vmem>>, %arg5: memref<2x1024xf32, #tpu.memory_space<vmem>>) attributes {dimension_semantics = [#tpu.dimension_semantics<parallel>, #tpu.dimension_semantics<arbitrary>], iteration_bounds = array<i64: 1, 1>, scalar_prefetch = 0 : i64, scratch_operands = 1 : i64, tpu.core_type = #tpu.core_type<tc>, window_params = [{transform_indices = @transform_0, window_bounds = array<i64: 2, 1024>}, {transform_indices = @transform_1, window_bounds = array<i64: 2, 1024>}, {transform_indices = @transform_2, window_bounds = array<i64: 1, 8, 128>}]} {
    %c0 = arith.constant 0 : index
    %c0_0 = arith.constant 0 : index
    %0 = vector.load %arg2[%c0, %c0_0] : memref<2x1024xf32, #tpu.memory_space<vmem>>, vector<2x1024xf32>
    %c0_1 = arith.constant 0 : index
    %c0_2 = arith.constant 0 : index
    %1 = vector.load %arg3[%c0_1, %c0_2] : memref<2x1024xf32, #tpu.memory_space<vmem>>, vector<2x1024xf32>
    %2 = math.log %0 : vector<2x1024xf32>
    %cst = arith.constant -1.000000e+02 : f32
    %3 = vector.broadcast %cst : f32 to vector<2x1024xf32>
    %4 = arith.maximumf %2, %3 : vector<2x1024xf32>
    %cst_3 = arith.constant 0.000000e+00 : f32
    %5 = vector.broadcast %cst_3 : f32 to vector<2x1024xf32>
    %6 = arith.subf %5, %0 : vector<2x1024xf32>
    %7 = math.log1p %6 : vector<2x1024xf32>
    %cst_4 = arith.constant -1.000000e+02 : f32
    %8 = vector.broadcast %cst_4 : f32 to vector<2x1024xf32>
    %9 = arith.maximumf %7, %8 : vector<2x1024xf32>
    %10 = arith.mulf %1, %4 : vector<2x1024xf32>
    %cst_5 = arith.constant 1.000000e+00 : f32
    %11 = vector.broadcast %cst_5 : f32 to vector<2x1024xf32>
    %12 = arith.subf %11, %1 : vector<2x1024xf32>
    %13 = arith.mulf %12, %9 : vector<2x1024xf32>
    %14 = arith.addf %10, %13 : vector<2x1024xf32>
    %cst_6 = arith.constant 0.000000e+00 : f32
    %15 = vector.broadcast %cst_6 : f32 to vector<2x1024xf32>
    %16 = arith.subf %15, %14 : vector<2x1024xf32>
    %cst_7 = arith.constant 0.000000e+00 : f32
    %17 = vector.broadcast %cst_7 : f32 to vector<2x1024xf32>
    %18 = arith.subf %17, %16 : vector<2x1024xf32>
    %19 = math.exp %18 : vector<2x1024xf32>
    %cst_8 = arith.constant 1.000000e+00 : f32
    %20 = vector.broadcast %cst_8 : f32 to vector<2x1024xf32>
    %21 = arith.subf %20, %19 : vector<2x1024xf32>
    %22 = arith.mulf %21, %21 : vector<2x1024xf32>
    %cst_9 = arith.constant 1.000000e+00 : f32
    %23 = vector.broadcast %cst_9 : f32 to vector<2x1024xf32>
    %24 = arith.mulf %23, %22 : vector<2x1024xf32>
    %25 = arith.mulf %24, %16 : vector<2x1024xf32>
    %c0_i32 = arith.constant 0 : i32
    %26 = arith.cmpi eq, %arg1, %c0_i32 : i32
    %27 = arith.extui %26 : i1 to i32
    %c0_i32_10 = arith.constant 0 : i32
    %28 = arith.cmpi ne, %27, %c0_i32_10 : i32
    scf.if %28 {
      %c0_15 = arith.constant 0 : index
      %c0_16 = arith.constant 0 : index
      %35 = vector.load %arg5[%c0_15, %c0_16] : memref<2x1024xf32, #tpu.memory_space<vmem>>, vector<2x1024xf32>
      tpu.vector_store %arg5[%c0_15, %c0_16], %25 {strides = array<i32>} : memref<2x1024xf32, #tpu.memory_space<vmem>>, vector<2x1024xf32>,
    } else {
    }
    %c0_i32_11 = arith.constant 0 : i32
    %29 = arith.cmpi sgt, %arg1, %c0_i32_11 : i32
    %30 = arith.extui %29 : i1 to i32
    %c0_i32_12 = arith.constant 0 : i32
    %31 = arith.cmpi ne, %30, %c0_i32_12 : i32
    scf.if %31 {
      %c0_15 = arith.constant 0 : index
      %c0_16 = arith.constant 0 : index
      %35 = vector.load %arg5[%c0_15, %c0_16] : memref<2x1024xf32, #tpu.memory_space<vmem>>, vector<2x1024xf32>
      %36 = arith.addf %35, %25 : vector<2x1024xf32>
      %c0_17 = arith.constant 0 : index
      %c0_18 = arith.constant 0 : index
      %37 = vector.load %arg5[%c0_17, %c0_18] : memref<2x1024xf32, #tpu.memory_space<vmem>>, vector<2x1024xf32>
      tpu.vector_store %arg5[%c0_17, %c0_18], %36 {strides = array<i32>} : memref<2x1024xf32, #tpu.memory_space<vmem>>, vector<2x1024xf32>,
    } else {
    }
    %c0_i32_13 = arith.constant 0 : i32
    %32 = arith.cmpi eq, %arg1, %c0_i32_13 : i32
    %33 = arith.extui %32 : i1 to i32
    %c0_i32_14 = arith.constant 0 : i32
    %34 = arith.cmpi ne, %33, %c0_i32_14 : i32
    scf.if %34 {
      %c0_15 = arith.constant 0 : index
      %c0_16 = arith.constant 0 : index
      %35 = vector.load %arg5[%c0_15, %c0_16] : memref<2x1024xf32, #tpu.memory_space<vmem>>, vector<2x1024xf32>
      %36 = vector.shape_cast %35 : vector<2x1024xf32> to vector<1x2x1024xf32>
      %cst_17 = arith.constant dense<0.000000e+00> : vector<1xf32>
      %37 = vector.multi_reduction <add>, %36, %cst_17 [1, 2] : vector<1x2x1024xf32> to vector<1xf32>
      %38 = vector.shape_cast %37 : vector<1xf32> to vector<1x1x1xf32>
      %39 = vector.extract %38[0, 0, 0] : f32 from vector<1x1x1xf32>
      %40 = vector.broadcast %39 : f32 to vector<1x8x128xf32>
      %c0_18 = arith.constant 0 : index
      %c0_19 = arith.constant 0 : index
      %c0_20 = arith.constant 0 : index
      %41 = vector.load %arg4[%c0_18, %c0_19, %c0_20] : memref<1x8x128xf32, #tpu.memory_space<vmem>>, vector<1x8x128xf32>
      tpu.vector_store %arg4[%c0_18, %c0_19, %c0_20], %40 {strides = array<i32>} : memref<1x8x128xf32, #tpu.memory_space<vmem>>, vector<1x8x128xf32>,
    } else {
    }
    return
  }
  func.func @transform_0(%arg0: i32, %arg1: i32) -> (i32, i32) {
    %c1_i32 = arith.constant 1 : i32
    %0 = arith.muli %arg0, %c1_i32 : i32
    %1 = arith.addi %0, %arg1 : i32
    %c0_i32 = arith.constant 0 : i32
    %c0_i32_0 = arith.constant 0 : i32
    return %1, %c0_i32 : i32, i32
  }
  func.func @transform_1(%arg0: i32, %arg1: i32) -> (i32, i32) {
    %c1_i32 = arith.constant 1 : i32
    %0 = arith.muli %arg0, %c1_i32 : i32
    %1 = arith.addi %0, %arg1 : i32
    %c0_i32 = arith.constant 0 : i32
    %c0_i32_0 = arith.constant 0 : i32
    return %1, %c0_i32 : i32, i32
  }
  func.func @transform_2(%arg0: i32, %arg1: i32) -> (i32, i32, i32) {
    %c0_i32 = arith.constant 0 : i32
    %c0_i32_0 = arith.constant 0 : i32
    %c0_i32_1 = arith.constant 0 : i32
    return %arg0, %c0_i32, %c0_i32_0 : i32, i32, i32
  }
}

</mosaic_0001>

<llo_original>
// kernel: tpu_custom_call.1
$region0: #{tpu_custom_call.1}
  #allocation0 [shape = 'u32[]', space=smem, size = 0x4, offset = 0x4, fixed_abs, tag = 'smem constant byte address 0x4 - core index']
  #allocation1 [shape = 'u32[144,128]{1,0:T(1,128)}', space=vmem, size = 0x12000, scoped, tag = 'internal scratch']
  #allocation2 [shape = 'f32[2,1024]{1,0:T(2,128)}', space=vmem, size = 0x2000, scoped, tag = 'scratch operand']
  %s0 = inlined_call_operand.hbm [shape: f32[2,1024], index: 0, kind: input, shape index: {}]
  %s1 = inlined_call_operand.hbm [shape: f32[2,1024], index: 1, kind: input, shape index: {}]
  %s2 = inlined_call_operand.hbm [shape: f32[1,8,128], index: 2, kind: output, shape index: {}]
  %s3 = sld [smem:[#allocation0]]
  $region38: #{tpu_custom_call.1} parent=0
    _
  %s5 = ssub.s32 1, %s3
  %s6 = scalar_select 0, %s5, %s3
  $region1: #{tpu_custom_call.1} parent=0
    #allocation3 [shape = 'u8[8192]{0}', space=vmem, size = 0x2000, scoped, tag = 'input window, operand 0, single buffered']
    #allocation4 [shape = 's32[1]{0}', space=sflag, size = 0x4, scoped, tag = 'scoped memory for tpu_custom_call.1']
    #allocation5 [shape = 's32[1]{0}', space=sflag, size = 0x4, scoped, tag = 'scoped memory for tpu_custom_call.1']
    #allocation6 [shape = 'u8[8192]{0}', space=vmem, size = 0x2000, scoped, tag = 'input window, operand 1, single buffered']
    #allocation7 [shape = 's32[1]{0}', space=sflag, size = 0x4, scoped, tag = 'scoped memory for tpu_custom_call.1']
    #allocation8 [shape = 'u8[4096]{0}', space=vmem, size = 0x1000, scoped, tag = 'output window, operand 0, single buffered']
    %7 = vsyncpa [#allocation4], 0
    %8 = vsyncpa [#allocation7], 0
    %9 = vsyncpa [#allocation5], 0
    // Predicated region
    $region2: #{tpu_custom_call.1} parent=1 // pred_check
      _
    $region3: #{tpu_custom_call.1} parent=1 // pred_check_branch
      %11 = sbr.rel (0) target = $region5
    $region4: #{tpu_custom_call.1} parent=1 // pred_region
      %s12 = sadd.s32 0, 0
      %s14 = ssub.s32 256, 256
      %15 = vsyncadd [#allocation4], %s14
      %s16 = smul.addr %s12, 8
      %s17 = smul.addr %s16, 32
      %s18 = scalar_lea.hbm %s0, %s17
      %s20 = sshll.u32 [#allocation3], 4
      %s21 = int_to_ptr.vmem [resolvable:$true] %s20
      %23 = dma.hbm_to_vmem [thread:$0]  %s18, 256, %s21, [#allocation4]
    $region5: #{tpu_custom_call.1} parent=1 // pred_fallthru
      _
    // Predicated region
    $region6: #{tpu_custom_call.1} parent=1 // pred_check
      _
    $region7: #{tpu_custom_call.1} parent=1 // pred_check_branch
      %25 = sbr.rel (0) target = $region9
    $region8: #{tpu_custom_call.1} parent=1 // pred_region
      %s26 = sadd.s32 0, 0
      %s28 = ssub.s32 256, 256
      %29 = vsyncadd [#allocation7], %s28
      %s30 = smul.addr %s26, 8
      %s31 = smul.addr %s30, 32
      %s32 = scalar_lea.hbm %s1, %s31
      %s34 = sshll.u32 [#allocation6], 4
      %s35 = int_to_ptr.vmem [resolvable:$true] %s34
      %37 = dma.hbm_to_vmem [thread:$0]  %s32, 256, %s35, [#allocation7]
    $region9: #{tpu_custom_call.1} parent=1 // pred_fallthru
      _
    // Predicated region
    $region10: #{tpu_custom_call.1} parent=1 // pred_check
      _
    $region11: #{tpu_custom_call.1} parent=1 // pred_check_branch
      %39 = sbr.rel (0) target = $region13
    $region12: #{tpu_custom_call.1} parent=1 // pred_region
      %40 = dma.done [#allocation4], 256
    $region13: #{tpu_custom_call.1} parent=1 // pred_fallthru
      _
    // Predicated region
    $region14: #{tpu_custom_call.1} parent=1 // pred_check
      _
    $region15: #{tpu_custom_call.1} parent=1 // pred_check_branch
      %42 = sbr.rel (0) target = $region17
    $region16: #{tpu_custom_call.1} parent=1 // pred_region
      %43 = dma.done [#allocation7], 256
    $region17: #{tpu_custom_call.1} parent=1 // pred_fallthru
      _
    %s44 = sadd.s32 0, 0
    %s45 = sadd.s32 0, 0
    %v46 = vld [vmem:[#allocation3] sm:$0xff]
    %v47 = vld [vmem:[#allocation3 + $0x8] sm:$0xff]
    %v48 = vld [vmem:[#allocation6] sm:$0xff]
    %v49 = vld [vmem:[#allocation6 + $0x8] sm:$0xff]
    %v50 = vlog2.pop %v46
    %v51 = vmul.f32 %v50, 0.6931472
    %v52 = vlog2.pop %v47
    %v53 = vmul.f32 %v52, 0.6931472
    %v54 = vmax.f32 %v51, -100.0
    %v55 = vmax.f32 %v53, -100.0
    %v56 = vsub.f32 0.0, %v46
    %v57 = vsub.f32 0.0, %v47
    %v58 = vadd.f32 %v56, 1.0
    %v59 = vlog2.pop %v58
    %v60 = vmul.f32 %v59, 0.6931472
    %v61 = vmul.f32 -0.5, %v56
    %v62 = vadd.f32 %v61, 1.0
    %v63 = vmul.f32 %v62, %v56
    %v64 = vand.u32 2147483647, %v56
    %vm65 = vcmp.lt.f32.partialorder %v64, 0.0004427343
    %v66 = vsel %vm65, %v63, %v60
    %v67 = vadd.f32 %v57, 1.0
    %v68 = vlog2.pop %v67
    %v69 = vmul.f32 %v68, 0.6931472
    %v70 = vmul.f32 -0.5, %v57
    %v71 = vadd.f32 %v70, 1.0
    %v72 = vmul.f32 %v71, %v57
    %v73 = vand.u32 2147483647, %v57
    %vm74 = vcmp.lt.f32.partialorder %v73, 0.0004427343
    %v75 = vsel %vm74, %v72, %v69
    %v76 = vmax.f32 %v66, -100.0
    %v77 = vmax.f32 %v75, -100.0
    %v78 = vmul.f32 %v48, %v54
    %v79 = vmul.f32 %v49, %v55
    %v80 = vsub.f32 1.0, %v48
    %v81 = vsub.f32 1.0, %v49
    %v82 = vmul.f32 %v80, %v76
    %v83 = vmul.f32 %v81, %v77
    %v84 = vadd.f32 %v78, %v82
    %v85 = vadd.f32 %v79, %v83
    %v86 = vsub.f32 0.0, %v84
    %v87 = vsub.f32 0.0, %v85
    %v88 = vsub.f32 0.0, %v86
    %v89 = vsub.f32 0.0, %v87
    %v90 = vmul.f32 %v88, 1.442695
    %v91 = vpow.pop %v90
    %v92 = vmul.f32 %v89, 1.442695
    %v93 = vpow.pop %v92
    %v94 = vsub.f32 1.0, %v91
    %v95 = vsub.f32 1.0, %v93
    %v96 = vmul.f32 %v94, %v94
    %v97 = vmul.f32 %v95, %v95
    %v98 = vmul.f32 %v96, %v86
    %v99 = vmul.f32 %v97, %v87
    %p100 = scmp.eq.s32.totalorder 0, 0
    // Predicated region
    $region18: #{tpu_custom_call.1} parent=1 // pred_check
      %p101 = pneg %p100
    $region19: #{tpu_custom_call.1} parent=1 // pred_check_branch
      %103 = sbr.rel (%p101) target = $region21
    $region20: #{tpu_custom_call.1} parent=1 // pred_region
      %104 = vst [vmem:[#allocation2] sm:$0xff] %v98
      %105 = vst [vmem:[#allocation2 + $0x8] sm:$0xff] %v99
    $region21: #{tpu_custom_call.1} parent=1 // pred_fallthru
      _
    %p106 = scmp.gt.s32.totalorder 0, 0
    // Predicated region
    $region22: #{tpu_custom_call.1} parent=1 // pred_check
      %p107 = pneg %p106
    $region23: #{tpu_custom_call.1} parent=1 // pred_check_branch
      %109 = sbr.rel (%p107) target = $region25
    $region24: #{tpu_custom_call.1} parent=1 // pred_region
      %v110 = vld [vmem:[#allocation2] sm:$0xff]
      %v111 = vld [vmem:[#allocation2 + $0x8] sm:$0xff]
      %v112 = vadd.f32 %v110, %v98
      %v113 = vadd.f32 %v111, %v99
      %114 = vst [vmem:[#allocation2] sm:$0xff] %v112
      %115 = vst [vmem:[#allocation2 + $0x8] sm:$0xff] %v113
    $region25: #{tpu_custom_call.1} parent=1 // pred_fallthru
      _
    // Predicated region
    $region26: #{tpu_custom_call.1} parent=1 // pred_check
      %p116 = pneg %p100
    $region27: #{tpu_custom_call.1} parent=1 // pred_check_branch
      %118 = sbr.rel (%p116) target = $region29
    $region28: #{tpu_custom_call.1} parent=1 // pred_region
      %v119 = vld [vmem:[#allocation2] sm:$0xff]
      %v120 = vld [vmem:[#allocation2 + $0x8] sm:$0xff]
      %v123 = vcombine.high %v119, %v119
      %v125 = vunpack.c.l.s4 1983009808
      %v126 = vunpack.c.0.s8 %v125
      %v127 = vlaneseq
      %v128 = vshrl.u32 %v127, 7
      %v129 = vsub.s32 %v126, %v128
      %v130 = vrot.slane %v119, %v129
      %v132 = vunpack.c.l.s4 1983009808
      %v133 = vunpack.c.0.s8 %v132
      %v134 = vlaneseq
      %v135 = vshrl.u32 %v134, 7
      %v136 = vsub.s32 %v133, %v135
      %v137 = vrot.slane %v123, %v136
      %v138 = vcombine.high %v130, %v130
      %v139 = vcombine.high %v137, %v137
      %v140 = vcombine.high %v120, %v120
      %v142 = vunpack.c.l.s4 1983009808
      %v143 = vunpack.c.0.s8 %v142
      %v144 = vlaneseq
      %v145 = vshrl.u32 %v144, 7
      %v146 = vsub.s32 %v143, %v145
      %v147 = vrot.slane %v120, %v146
      %v149 = vunpack.c.l.s4 1983009808
      %v150 = vunpack.c.0.s8 %v149
      %v151 = vlaneseq
      %v152 = vshrl.u32 %v151, 7
      %v153 = vsub.s32 %v150, %v152
      %v154 = vrot.slane %v140, %v153
      %v155 = vcombine.high %v147, %v147
      %v156 = vcombine.high %v154, %v154
      %vm165 = vcmask 1041408
      %v166 = vsel %vm165, %v130, 0.0
      %v167 = vsel %vm165, %v138, 0.0
      %v168 = vadd.f32 %v166, %v167
      %v169 = vsel %vm165, %v137, 0.0
      %v170 = vadd.f32 %v168, %v169
      %v171 = vsel %vm165, %v139, 0.0
      %v172 = vadd.f32 %v170, %v171
      %v173 = vsel %vm165, %v147, 0.0
      %v174 = vadd.f32 %v172, %v173
      %v175 = vsel %vm165, %v155, 0.0
      %v176 = vadd.f32 %v174, %v175
      %v177 = vsel %vm165, %v154, 0.0
      %v178 = vadd.f32 %v176, %v177
      %v179 = vsel %vm165, %v156, 0.0
      %v180 = vadd.f32 %v178, %v179
      %181 = vadd.xlane.f32.xlu0 %v180
      %v182 = vpop.xlane.xlu0 %181
      %v183 = vrot.slane %v182, 4
      %v184 = vadd.f32 %v182, %v183
      %v185 = vrot.slane %v184, 2
      %v186 = vadd.f32 %v184, %v185
      %v187 = vrot.slane %v186, 1
      %v188 = vadd.f32 %v186, %v187
      %s189 = vtos %v188
      %v190 = vstv %s189
      %191 = vst [vmem:[#allocation8] sm:$0xff] %v190
    $region29: #{tpu_custom_call.1} parent=1 // pred_fallthru
      _
    // Predicated region
    $region30: #{tpu_custom_call.1} parent=1 // pred_check
      _
    $region31: #{tpu_custom_call.1} parent=1 // pred_check_branch
      %193 = sbr.rel (0) target = $region33
    $region32: #{tpu_custom_call.1} parent=1 // pred_region
      %s195 = ssub.s32 128, 128
      %196 = vsyncadd [#allocation5], %s195
      %s198 = sshll.u32 [#allocation8], 4
      %s199 = int_to_ptr.vmem [resolvable:$true] %s198
      %201 = dma.vmem_to_hbm [thread:$0]  %s199, 128, %s2, [#allocation5]
    $region33: #{tpu_custom_call.1} parent=1 // pred_fallthru
      _
    // Predicated region
    $region34: #{tpu_custom_call.1} parent=1 // pred_check
      _
    $region35: #{tpu_custom_call.1} parent=1 // pred_check_branch
      %203 = sbr.rel (0) target = $region37
    $region36: #{tpu_custom_call.1} parent=1 // pred_region
      %204 = dma.done [#allocation5], 128
    $region37: #{tpu_custom_call.1} parent=1 // pred_fallthru
      _
    %205 = vsyncpa [#allocation4], 1
    %206 = vsyncpa [#allocation7], 1
    %207 = vsyncpa [#allocation5], 1

</llo_original>
